<compile_context>
chip_gen: v5e
topology: v5e:2x2
jax: 0.10.0
libtpu: 0.0.40
codegen_flags: <defaults>
</compile_context>

<pallas_src>
import functools

import jax
import jax.numpy as jnp
from jax import lax
from jax.experimental import pallas as pl
from jax.experimental.pallas import tpu as pltpu


# ----------------------------------------------------------------------------- helpers
def _fold_bn(gamma, beta, mean, var, eps=1e-5):
    """Fold eval-mode BatchNorm into a per-channel scale/bias."""
    scale = gamma / jnp.sqrt(var + eps)
    bias = beta - mean * scale
    return scale.astype(jnp.float32), bias.astype(jnp.float32)


def _make_divisible(v, divisor=8, min_value=None, round_limit=0.9):
    """timm helper used by SqueezeExcite to pick the reduced channel count."""
    min_value = min_value or divisor
    new_v = max(min_value, int(v + divisor / 2) // divisor * divisor)
    if new_v < round_limit * v:
        new_v += divisor
    return new_v


# ----------------------------------------------------------------------------- fused kernel
def _patch_merging_kernel(x_ref, w1_ref, b1_ref, w2_ref, b2_ref,
                          wr_ref, br_ref, we_ref, be_ref, w3_ref, b3_ref,
                          o_ref, *, Bb, Ho, hid, L):
    # x_ref  : (4*Bb*Ho, Wo*Cin)  rows=(row-parity a, col-parity b, img, oh), lanes=(ow,cin)
    # w1_ref : (Wo*Cin, L)        block-diag(conv1 * bn1-scale) over ow groups
    # w2_ref : (9, L)             depthwise taps (kh*3+kw), BN2 scale folded, tiled over ow
    # wr_ref : (L, rd)            SE squeeze weight with the global avg-pool folded in
    # we_ref : (rd, L)            SE expand weight tiled over ow
    # w3_ref : (L, Lo_pad)        block-diag(conv3 * bn3-scale), zero-padded to 128 lanes
    # o_ref  : (Bb*Ho, Lo_pad)    rows=(img, oh), lanes=(ow, out_dim) + zero pad
    R = Bb * Ho
    xq = x_ref[...].astype(jnp.float32)                                   # (4R, Wo*Cin)

    # --- conv1 (1x1) + BN1 + ReLU (single block-diag matmul; no duplicated shifted half)
    h1 = jnp.maximum(
        jnp.dot(xq, w1_ref[...], preferred_element_type=jnp.float32) + b1_ref[...], 0.0)

    def quad(a, b):                       # rows of parity (a, b): (R, L), rows=(img, oh)
        q = 2 * a + b
        return h1[q * R:(q + 1) * R, :]

    # kw=0 needs input col 2*ow-1 -> odd-col quad shifted by one ow group: lane roll by
    # `hid` (XLU) with the ow=0 group zeroed (models conv2's left zero padding).
    lane = lax.broadcasted_iota(jnp.int32, (1, L), 1)

    def shift_ow(t):
        return jnp.where(lane < hid, 0.0, pltpu.roll(t, shift=hid, axis=1))

    def tap(k):                                                           # (1, L)
        return w2_ref[k:k + 1, :]

    q00, q01 = quad(0, 0), quad(0, 1)
    q10, q11 = quad(1, 0), quad(1, 1)
    q01s, q11s = shift_ow(q01), shift_ow(q11)

    def row_mac(kh, qs, qe, qo):          # kw=0 (shifted odd), kw=1 (even), kw=2 (odd)
        return tap(3 * kh + 0) * qs + tap(3 * kh + 1) * qe + tap(3 * kh + 2) * qo

    # --- depthwise 3x3 / stride 2 / pad 1 (+ folded BN2) as lane-dense VPU MACs ---
    acc = row_mac(1, q01s, q00, q01) + row_mac(2, q11s, q10, q11)
    # kh=0 taps read input row 2*oh-1: sublane roll by 1, zero every image's oh=0 row
    top = row_mac(0, q11s, q10, q11)
    row = lax.broadcasted_iota(jnp.int32, (R, 1), 0)
    top = jnp.where(row % Ho == 0, 0.0, pltpu.roll(top, shift=1, axis=0))
    h2 = jnp.maximum(acc + top + b2_ref[...], 0.0)                        # (R, L)

    # --- SqueezeExcite: per-image global mean (folded into wr) -> ReLU -> sigmoid gate
    pooled = jnp.concatenate(
        [jnp.sum(h2[i * Ho:(i + 1) * Ho, :], axis=0, keepdims=True) for i in range(Bb)],
        axis=0)                                                           # (Bb, L)
    red = jnp.maximum(
        jnp.dot(pooled, wr_ref[...], preferred_element_type=jnp.float32) + br_ref[...],
        0.0)                                                              # (Bb, rd)
    gate = jax.nn.sigmoid(
        jnp.dot(red, we_ref[...], preferred_element_type=jnp.float32) + be_ref[...])
    gated = (h2.reshape(Bb, Ho, L) * gate[:, None, :]).reshape(R, L)

    # --- conv3 (1x1) + BN3 (scale folded); lane-dense (zero-padded) output store ---
    out = jnp.dot(gated, w3_ref[...], preferred_element_type=jnp.float32) + b3_ref[...]
    o_ref[...] = out.astype(o_ref.dtype)                                  # (R, Lo_pad)


# ----------------------------------------------------------------------------- wrapper
def patch_merging(x_nchw, params):
    (w1, s1, b1, w2, s2, b2, w_se_r, b_se_r, w_se_e, b_se_e, w3, s3, b3) = params
    B, Cin, H, W = x_nchw.shape
    hid = w1.shape[1]
    out_dim = w3.shape[1]
    rd = w_se_r.shape[1]
    assert H % 2 == 0 and W % 2 == 0, "stride-2 patch merge expects even spatial dims"
    Ho, Wo = H // 2, W // 2
    L = Wo * hid
    Lo = Wo * out_dim
    Lo_pad = ((Lo + 127) // 128) * 128              # lane-dense (unmasked) output stores
    f32 = jnp.float32

    # Batch Bb images per grid step so the conv1 matmul has >= ~256 rows when possible.
    target = max(1, -(-256 // (4 * Ho)))
    Bb = 1
    for cand in range(1, B + 1):
        if B % cand == 0 and cand <= target:
            Bb = cand
    nb = B // Bb
    R = Bb * Ho
    # Note: best layout when R % 8 == 0 and L % 128 == 0 (true here); otherwise the
    # static quad slices become relayout copies (still correct, just slower).

    # ---- host-side packing: fold BN scales into weights, build lane-dense operands ----
    w1_bd = jnp.kron(jnp.eye(Wo, dtype=f32), (w1 * s1[None, :]).astype(f32))  # (Wo*Cin, L)
    b1_t = jnp.tile(b1, Wo).reshape(1, L).astype(f32)
    w2p = (w2 * s2[None, None, :]).reshape(9, hid).astype(f32)
    w2_t = jnp.tile(w2p, (1, Wo))                                             # (9, L)
    b2_t = jnp.tile(b2, Wo).reshape(1, L).astype(f32)
    wr = (jnp.tile(w_se_r, (Wo, 1)) / float(Ho * Wo)).astype(f32)             # (L, rd)
    br = b_se_r.reshape(1, rd).astype(f32)
    we = jnp.tile(w_se_e, (1, Wo)).astype(f32)                                # (rd, L)
    be = jnp.tile(b_se_e, Wo).reshape(1, L).astype(f32)
    w3_bd = jnp.kron(jnp.eye(Wo, dtype=f32), (w3 * s3[None, :]).astype(f32))  # (L, Lo)
    w3_bd = jnp.pad(w3_bd, ((0, 0), (0, Lo_pad - Lo)))
    b3_t = jnp.pad(jnp.tile(b3, Wo).astype(f32), (0, Lo_pad - Lo)).reshape(1, Lo_pad)

    # NCHW -> per grid block rows=(row-parity a, col-parity b, img, oh), lanes=(ow, cin)
    x_nhwc = jnp.transpose(x_nchw, (0, 2, 3, 1))
    x_packed = (x_nhwc.reshape(B, Ho, 2, Wo, 2, Cin)
                .transpose(2, 4, 0, 1, 3, 5)                 # (a, b, img, oh, ow, c)
                .reshape(2, 2, nb, Bb, Ho, Wo, Cin)
                .transpose(2, 0, 1, 3, 4, 5, 6)              # (nb, a, b, Bb, oh, ow, c)
                .reshape(nb, 4 * R, Wo * Cin))

    kernel = functools.partial(_patch_merging_kernel, Bb=Bb, Ho=Ho, hid=hid, L=L)
    const = lambda g: (0, 0)
    # Constant-index weights: single-buffer (no point double-buffering re-used operands).
    wspec = lambda shape: pl.BlockSpec(shape, const, pipeline_mode=pl.Buffered(1))

    flops = 2 * B * (H * W * Cin * hid + Ho * Wo * 9 * hid
                     + 2 * hid * rd + Ho * Wo * hid * out_dim)
    bytes_accessed = 4 * (x_packed.size + nb * R * Lo_pad
                          + w1_bd.size + w2_t.size + wr.size + we.size + w3_bd.size
                          + b1_t.size + b2_t.size + br.size + be.size + b3_t.size)

    out = pl.pallas_call(
        kernel,
        out_shape=jax.ShapeDtypeStruct((nb, R, Lo_pad), x_nchw.dtype),
        grid_spec=pltpu.PrefetchScalarGridSpec(
            num_scalar_prefetch=0,
            grid=(nb,),
            in_specs=[
                pl.BlockSpec((None, 4 * R, Wo * Cin), lambda g: (g, 0, 0)),
                wspec((Wo * Cin, L)),
                wspec((1, L)),
                wspec((9, L)),
                wspec((1, L)),
                wspec((L, rd)),
                wspec((1, rd)),
                wspec((rd, L)),
                wspec((1, L)),
                wspec((L, Lo_pad)),
                wspec((1, Lo_pad)),
            ],
            out_specs=pl.BlockSpec((None, R, Lo_pad), lambda g: (g, 0, 0)),
        ),
        compiler_params=pltpu.CompilerParams(
            dimension_semantics=("parallel",),
            vmem_limit_bytes=64 * 1024 * 1024),
        cost_estimate=pl.CostEstimate(flops=flops, transcendentals=B * hid * Wo,
                                      bytes_accessed=bytes_accessed),
    )(x_packed, w1_bd, b1_t, w2_t, b2_t, wr, br, we, be, w3_bd, b3_t)

    # drop the lane padding; rows are (img, oh), lanes are (ow, co)   (layout glue)
    out = out[:, :, :Lo].reshape(nb, Bb, Ho, Wo, out_dim).reshape(B, Ho, Wo, out_dim)
    return jnp.transpose(out, (0, 3, 1, 2))


# ----------------------------------------------------------------------------- pure-JAX reference
def reference(x_nchw, params):
    (w1, s1, b1, w2, s2, b2, w_se_r, b_se_r, w_se_e, b_se_e, w3, s3, b3) = params
    hid = w1.shape[1]
    x = jnp.transpose(x_nchw, (0, 2, 3, 1))
    dn = ("NHWC", "HWIO", "NHWC")
    h = lax.conv_general_dilated(x, w1.reshape(1, 1, *w1.shape), (1, 1), "VALID",
                                 dimension_numbers=dn)
    h = jnp.maximum(h * s1 + b1, 0.0)
    h = lax.conv_general_dilated(h, w2[:, :, None, :], (2, 2), ((1, 1), (1, 1)),
                                 dimension_numbers=dn, feature_group_count=hid)
    h = jnp.maximum(h * s2 + b2, 0.0)
    m = h.mean(axis=(1, 2))
    r = jnp.maximum(m @ w_se_r + b_se_r, 0.0)
    g = jax.nn.sigmoid(r @ w_se_e + b_se_e)
    h = h * g[:, None, None, :]
    o = lax.conv_general_dilated(h, w3.reshape(1, 1, *w3.shape), (1, 1), "VALID",
                                 dimension_numbers=dn)
    o = o * s3 + b3
    return jnp.transpose(o, (0, 3, 1, 2))


# ----------------------------------------------------------------------------- main
if __name__ == "__main__":
    B, dim, H, W = 2, 4, 16, 16
    out_dim = 8
    hid = dim * 4                                   # PatchMerging: hid_dim = 4 * dim
    rd = _make_divisible(hid * 0.25)                # timm SqueezeExcite reduced channels

    key = jax.random.PRNGKey(0)
    ks = jax.random.split(key, 8)
    x_nchw = jax.random.normal(ks[0], (B, dim, H, W), jnp.float32)

    # Conv weights (deterministic synthetic init); BN at its __init__ values
    # (gamma = 1, beta = 0, running_mean = 0, running_var = 1), folded.
    w1 = jax.random.normal(ks[1], (dim, hid), jnp.float32) * 0.2
    w2 = jax.random.normal(ks[2], (3, 3, hid), jnp.float32) * 0.2      # depthwise (kh,kw,c)
    w3 = jax.random.normal(ks[3], (hid, out_dim), jnp.float32) * 0.2
    w_se_r = jax.random.normal(ks[4], (hid, rd), jnp.float32) * 0.2
    b_se_r = jax.random.normal(ks[5], (rd,), jnp.float32) * 0.1
    w_se_e = jax.random.normal(ks[6], (rd, hid), jnp.float32) * 0.2
    b_se_e = jax.random.normal(ks[7], (hid,), jnp.float32) * 0.1

    eps = 1e-5
    s1, b1 = _fold_bn(jnp.ones(hid), jnp.zeros(hid), jnp.zeros(hid), jnp.ones(hid), eps)
    s2, b2 = _fold_bn(jnp.ones(hid), jnp.zeros(hid), jnp.zeros(hid), jnp.ones(hid), eps)
    s3, b3 = _fold_bn(jnp.ones(out_dim), jnp.zeros(out_dim),
                      jnp.zeros(out_dim), jnp.ones(out_dim), eps)

    params = (w1, s1, b1, w2, s2, b2, w_se_r, b_se_r, w_se_e, b_se_e, w3, s3, b3)

    out = patch_merging(x_nchw, params)
    out = jax.block_until_ready(out)

    ref = jax.block_until_ready(reference(x_nchw, params))
    assert out.shape == (B, out_dim, H // 2, W // 2), out.shape
    max_err = float(jnp.max(jnp.abs(out - ref)))
    assert max_err < 1e-3, f"mismatch vs reference: {max_err}"

    print("KERNEL_OK")
</pallas_src>

<mosaic_0001>
module attributes {stable_mosaic.version = 11 : i64} {
  func.func @_patch_merging_kernel(%arg0: i32, %arg1: memref<1x64x32xf32, #tpu.memory_space<vmem>>, %arg2: memref<32x128xf32, #tpu.memory_space<vmem>>, %arg3: memref<1x128xf32, #tpu.memory_space<vmem>>, %arg4: memref<9x128xf32, #tpu.memory_space<vmem>>, %arg5: memref<1x128xf32, #tpu.memory_space<vmem>>, %arg6: memref<128x8xf32, #tpu.memory_space<vmem>>, %arg7: memref<1x8xf32, #tpu.memory_space<vmem>>, %arg8: memref<8x128xf32, #tpu.memory_space<vmem>>, %arg9: memref<1x128xf32, #tpu.memory_space<vmem>>, %arg10: memref<128x128xf32, #tpu.memory_space<vmem>>, %arg11: memref<1x128xf32, #tpu.memory_space<vmem>>, %arg12: memref<1x16x128xf32, #tpu.memory_space<vmem>>) attributes {dimension_semantics = [#tpu.dimension_semantics<parallel>], iteration_bounds = array<i64: 1>, scalar_prefetch = 0 : i64, scratch_operands = 0 : i64, tpu.core_type = #tpu.core_type<tc>, window_params = [{transform_indices = @transform_0, window_bounds = array<i64: 1, 64, 32>}, {pipeline_mode = #tpu.pipeline_mode<synchronous>, transform_indices = @transform_1, window_bounds = array<i64: 32, 128>}, {pipeline_mode = #tpu.pipeline_mode<synchronous>, transform_indices = @transform_2, window_bounds = array<i64: 1, 128>}, {pipeline_mode = #tpu.pipeline_mode<synchronous>, transform_indices = @transform_3, window_bounds = array<i64: 9, 128>}, {pipeline_mode = #tpu.pipeline_mode<synchronous>, transform_indices = @transform_4, window_bounds = array<i64: 1, 128>}, {pipeline_mode = #tpu.pipeline_mode<synchronous>, transform_indices = @transform_5, window_bounds = array<i64: 128, 8>}, {pipeline_mode = #tpu.pipeline_mode<synchronous>, transform_indices = @transform_6, window_bounds = array<i64: 1, 8>}, {pipeline_mode = #tpu.pipeline_mode<synchronous>, transform_indices = @transform_7, window_bounds = array<i64: 8, 128>}, {pipeline_mode = #tpu.pipeline_mode<synchronous>, transform_indices = @transform_8, window_bounds = array<i64: 1, 128>}, {pipeline_mode = #tpu.pipeline_mode<synchronous>, transform_indices = @transform_9, window_bounds = array<i64: 128, 128>}, {pipeline_mode = #tpu.pipeline_mode<synchronous>, transform_indices = @transform_10, window_bounds = array<i64: 1, 128>}, {transform_indices = @transform_11, window_bounds = array<i64: 1, 16, 128>}]} {
    %c0 = arith.constant 0 : index
    %c0_0 = arith.constant 0 : index
    %c0_1 = arith.constant 0 : index
    %0 = vector.load %arg1[%c0, %c0_0, %c0_1] : memref<1x64x32xf32, #tpu.memory_space<vmem>>, vector<1x64x32xf32>
    %1 = vector.shape_cast %0 : vector<1x64x32xf32> to vector<64x32xf32>
    %c0_2 = arith.constant 0 : index
    %c0_3 = arith.constant 0 : index
    %2 = vector.load %arg2[%c0_2, %c0_3] : memref<32x128xf32, #tpu.memory_space<vmem>>, vector<32x128xf32>
    %cst = arith.constant dense<0.000000e+00> : vector<64x128xf32>
    %3 = tpu.matmul %1, %2, %cst {dimension_numbers = #tpu.dot_dimension_numbers<[1], [0], [0], [1], [0, 0, 1, 1], [], []>} : vector<64x32xf32>, vector<32x128xf32>, vector<64x128xf32> -> vector<64x128xf32>
    %c0_4 = arith.constant 0 : index
    %c0_5 = arith.constant 0 : index
    %4 = vector.load %arg3[%c0_4, %c0_5] : memref<1x128xf32, #tpu.memory_space<vmem>>, vector<1x128xf32>
    %5 = vector.broadcast %4 : vector<1x128xf32> to vector<64x128xf32>
    %6 = arith.addf %3, %5 : vector<64x128xf32>
    %cst_6 = arith.constant 0.000000e+00 : f32
    %7 = vector.broadcast %cst_6 : f32 to vector<64x128xf32>
    %8 = arith.maximumf %6, %7 : vector<64x128xf32>
    %9 = tpu.iota {dimensions = array<i32: 1>} : vector<1x128xi32>
    %10 = vector.extract_strided_slice %8 {offsets = [0, 0], sizes = [16, 128], strides = [1, 1]} : vector<64x128xf32> to vector<16x128xf32>
    %11 = vector.extract_strided_slice %8 {offsets = [16, 0], sizes = [16, 128], strides = [1, 1]} : vector<64x128xf32> to vector<16x128xf32>
    %12 = vector.extract_strided_slice %8 {offsets = [32, 0], sizes = [16, 128], strides = [1, 1]} : vector<64x128xf32> to vector<16x128xf32>
    %13 = vector.extract_strided_slice %8 {offsets = [48, 0], sizes = [16, 128], strides = [1, 1]} : vector<64x128xf32> to vector<16x128xf32>
    %c16_i32 = arith.constant 16 : i32
    %14 = vector.broadcast %c16_i32 : i32 to vector<1x128xi32>
    %15 = arith.cmpi slt, %9, %14 : vector<1x128xi32>
    %c16_i32_7 = arith.constant 16 : i32
    %16 = tpu.dynamic_rotate %11 by %c16_i32_7 dim 1 : vector<16x128xf32>, i32 -> vector<16x128xf32>
    %cst_8 = arith.constant 0.000000e+00 : f32
    %17 = vector.shape_cast %15 : vector<1x128xi1> to vector<1x128xi1>
    %18 = vector.broadcast %17 : vector<1x128xi1> to vector<16x128xi1>
    %19 = vector.broadcast %cst_8 : f32 to vector<16x128xf32>
    %20 = arith.select %18, %19, %16 : vector<16x128xi1>, vector<16x128xf32>
    %c16_i32_9 = arith.constant 16 : i32
    %21 = vector.broadcast %c16_i32_9 : i32 to vector<1x128xi32>
    %22 = arith.cmpi slt, %9, %21 : vector<1x128xi32>
    %c16_i32_10 = arith.constant 16 : i32
    %23 = tpu.dynamic_rotate %13 by %c16_i32_10 dim 1 : vector<16x128xf32>, i32 -> vector<16x128xf32>
    %cst_11 = arith.constant 0.000000e+00 : f32
    %24 = vector.shape_cast %22 : vector<1x128xi1> to vector<1x128xi1>
    %25 = vector.broadcast %24 : vector<1x128xi1> to vector<16x128xi1>
    %26 = vector.broadcast %cst_11 : f32 to vector<16x128xf32>
    %27 = arith.select %25, %26, %23 : vector<16x128xi1>, vector<16x128xf32>
    %c3 = arith.constant 3 : index
    %c0_12 = arith.constant 0 : index
    %28 = vector.load %arg4[%c3, %c0_12] : memref<9x128xf32, #tpu.memory_space<vmem>>, vector<1x128xf32>
    %29 = vector.broadcast %28 : vector<1x128xf32> to vector<16x128xf32>
    %30 = arith.mulf %29, %20 : vector<16x128xf32>
    %c4 = arith.constant 4 : index
    %c0_13 = arith.constant 0 : index
    %31 = vector.load %arg4[%c4, %c0_13] : memref<9x128xf32, #tpu.memory_space<vmem>>, vector<1x128xf32>
    %32 = vector.broadcast %31 : vector<1x128xf32> to vector<16x128xf32>
    %33 = arith.mulf %32, %10 : vector<16x128xf32>
    %34 = arith.addf %30, %33 : vector<16x128xf32>
    %c5 = arith.constant 5 : index
    %c0_14 = arith.constant 0 : index
    %35 = vector.load %arg4[%c5, %c0_14] : memref<9x128xf32, #tpu.memory_space<vmem>>, vector<1x128xf32>
    %36 = vector.broadcast %35 : vector<1x128xf32> to vector<16x128xf32>
    %37 = arith.mulf %36, %11 : vector<16x128xf32>
    %38 = arith.addf %34, %37 : vector<16x128xf32>
    %c6 = arith.constant 6 : index
    %c0_15 = arith.constant 0 : index
    %39 = vector.load %arg4[%c6, %c0_15] : memref<9x128xf32, #tpu.memory_space<vmem>>, vector<1x128xf32>
    %40 = vector.broadcast %39 : vector<1x128xf32> to vector<16x128xf32>
    %41 = arith.mulf %40, %27 : vector<16x128xf32>
    %c7 = arith.constant 7 : index
    %c0_16 = arith.constant 0 : index
    %42 = vector.load %arg4[%c7, %c0_16] : memref<9x128xf32, #tpu.memory_space<vmem>>, vector<1x128xf32>
    %43 = vector.broadcast %42 : vector<1x128xf32> to vector<16x128xf32>
    %44 = arith.mulf %43, %12 : vector<16x128xf32>
    %45 = arith.addf %41, %44 : vector<16x128xf32>
    %c8 = arith.constant 8 : index
    %c0_17 = arith.constant 0 : index
    %46 = vector.load %arg4[%c8, %c0_17] : memref<9x128xf32, #tpu.memory_space<vmem>>, vector<1x128xf32>
    %47 = vector.broadcast %46 : vector<1x128xf32> to vector<16x128xf32>
    %48 = arith.mulf %47, %13 : vector<16x128xf32>
    %49 = arith.addf %45, %48 : vector<16x128xf32>
    %50 = arith.addf %38, %49 : vector<16x128xf32>
    %c0_18 = arith.constant 0 : index
    %c0_19 = arith.constant 0 : index
    %51 = vector.load %arg4[%c0_18, %c0_19] : memref<9x128xf32, #tpu.memory_space<vmem>>, vector<1x128xf32>
    %52 = vector.broadcast %51 : vector<1x128xf32> to vector<16x128xf32>
    %53 = arith.mulf %52, %27 : vector<16x128xf32>
    %c1 = arith.constant 1 : index
    %c0_20 = arith.constant 0 : index
    %54 = vector.load %arg4[%c1, %c0_20] : memref<9x128xf32, #tpu.memory_space<vmem>>, vector<1x128xf32>
    %55 = vector.broadcast %54 : vector<1x128xf32> to vector<16x128xf32>
    %56 = arith.mulf %55, %12 : vector<16x128xf32>
    %57 = arith.addf %53, %56 : vector<16x128xf32>
    %c2 = arith.constant 2 : index
    %c0_21 = arith.constant 0 : index
    %58 = vector.load %arg4[%c2, %c0_21] : memref<9x128xf32, #tpu.memory_space<vmem>>, vector<1x128xf32>
    %59 = vector.broadcast %58 : vector<1x128xf32> to vector<16x128xf32>
    %60 = arith.mulf %59, %13 : vector<16x128xf32>
    %61 = arith.addf %57, %60 : vector<16x128xf32>
    %62 = tpu.iota {dimensions = array<i32: 0>} : vector<16x1xi32>
    %c8_i32 = arith.constant 8 : i32
    %c0_i32 = arith.constant 0 : i32
    %63 = arith.cmpi eq, %c8_i32, %c0_i32 : i32
    %c1_i32 = arith.constant 1 : i32
    %64 = arith.select %63, %c1_i32, %c8_i32 : i32
    %65 = vector.broadcast %64 : i32 to vector<16x1xi32>
    %66 = arith.remsi %62, %65 : vector<16x1xi32>
    %c0_i32_22 = arith.constant 0 : i32
    %67 = vector.broadcast %c0_i32_22 : i32 to vector<16x1xi32>
    %68 = arith.cmpi ne, %66, %67 : vector<16x1xi32>
    %c0_i32_23 = arith.constant 0 : i32
    %69 = vector.broadcast %c0_i32_23 : i32 to vector<16x1xi32>
    %70 = arith.cmpi slt, %66, %69 : vector<16x1xi32>
    %c0_i32_24 = arith.constant 0 : i32
    %71 = arith.cmpi slt, %64, %c0_i32_24 : i32
    %72 = vector.broadcast %71 : i1 to vector<16x1xi1>
    %73 = vector.broadcast %72 : vector<16x1xi1> to vector<16x1xi1>
    %74 = arith.xori %70, %73 : vector<16x1xi1>
    %75 = arith.andi %74, %68 : vector<16x1xi1>
    %76 = vector.broadcast %64 : i32 to vector<16x1xi32>
    %77 = arith.addi %66, %76 : vector<16x1xi32>
    %78 = arith.select %75, %77, %66 : vector<16x1xi1>, vector<16x1xi32>
    %c0_i32_25 = arith.constant 0 : i32
    %79 = vector.broadcast %c0_i32_25 : i32 to vector<16x1xi32>
    %80 = arith.cmpi eq, %78, %79 : vector<16x1xi32>
    %c1_i32_26 = arith.constant 1 : i32
    %81 = tpu.dynamic_rotate %61 by %c1_i32_26 dim 0 : vector<16x128xf32>, i32 -> vector<16x128xf32>
    %cst_27 = arith.constant 0.000000e+00 : f32
    %82 = vector.shape_cast %80 : vector<16x1xi1> to vector<16x1xi1>
    %83 = vector.broadcast %82 : vector<16x1xi1> to vector<16x128xi1>
    %84 = vector.broadcast %cst_27 : f32 to vector<16x128xf32>
    %85 = arith.select %83, %84, %81 : vector<16x128xi1>, vector<16x128xf32>
    %86 = arith.addf %50, %85 : vector<16x128xf32>
    %c0_28 = arith.constant 0 : index
    %c0_29 = arith.constant 0 : index
    %87 = vector.load %arg5[%c0_28, %c0_29] : memref<1x128xf32, #tpu.memory_space<vmem>>, vector<1x128xf32>
    %88 = vector.broadcast %87 : vector<1x128xf32> to vector<16x128xf32>
    %89 = arith.addf %86, %88 : vector<16x128xf32>
    %cst_30 = arith.constant 0.000000e+00 : f32
    %90 = vector.broadcast %cst_30 : f32 to vector<16x128xf32>
    %91 = arith.maximumf %89, %90 : vector<16x128xf32>
    %92 = vector.extract_strided_slice %91 {offsets = [0, 0], sizes = [8, 128], strides = [1, 1]} : vector<16x128xf32> to vector<8x128xf32>
    %cst_31 = arith.constant dense<0.000000e+00> : vector<128xf32>
    %93 = vector.multi_reduction <add>, %92, %cst_31 [0] : vector<8x128xf32> to vector<128xf32>
    %94 = vector.shape_cast %93 : vector<128xf32> to vector<1x128xf32>
    %95 = vector.extract_strided_slice %91 {offsets = [8, 0], sizes = [8, 128], strides = [1, 1]} : vector<16x128xf32> to vector<8x128xf32>
    %cst_32 = arith.constant dense<0.000000e+00> : vector<128xf32>
    %96 = vector.multi_reduction <add>, %95, %cst_32 [0] : vector<8x128xf32> to vector<128xf32>
    %97 = vector.shape_cast %96 : vector<128xf32> to vector<1x128xf32>
    %98 = tpu.concatenate %94, %97 in 0 : vector<1x128xf32>, vector<1x128xf32> -> vector<2x128xf32>
    %c0_33 = arith.constant 0 : index
    %c0_34 = arith.constant 0 : index
    %99 = vector.load %arg6[%c0_33, %c0_34] : memref<128x8xf32, #tpu.memory_space<vmem>>, vector<128x8xf32>
    %cst_35 = arith.constant dense<0.000000e+00> : vector<2x8xf32>
    %100 = tpu.matmul %98, %99, %cst_35 {dimension_numbers = #tpu.dot_dimension_numbers<[1], [0], [0], [1], [0, 0, 1, 1], [], []>} : vector<2x128xf32>, vector<128x8xf32>, vector<2x8xf32> -> vector<2x8xf32>
    %c0_36 = arith.constant 0 : index
    %c0_37 = arith.constant 0 : index
    %101 = vector.load %arg7[%c0_36, %c0_37] : memref<1x8xf32, #tpu.memory_space<vmem>>, vector<1x8xf32>
    %102 = vector.broadcast %101 : vector<1x8xf32> to vector<2x8xf32>
    %103 = arith.addf %100, %102 : vector<2x8xf32>
    %cst_38 = arith.constant 0.000000e+00 : f32
    %104 = vector.broadcast %cst_38 : f32 to vector<2x8xf32>
    %105 = arith.maximumf %103, %104 : vector<2x8xf32>
    %c0_39 = arith.constant 0 : index
    %c0_40 = arith.constant 0 : index
    %106 = vector.load %arg8[%c0_39, %c0_40] : memref<8x128xf32, #tpu.memory_space<vmem>>, vector<8x128xf32>
    %cst_41 = arith.constant dense<0.000000e+00> : vector<2x128xf32>
    %107 = tpu.matmul %105, %106, %cst_41 {dimension_numbers = #tpu.dot_dimension_numbers<[1], [0], [0], [1], [0, 0, 1, 1], [], []>} : vector<2x8xf32>, vector<8x128xf32>, vector<2x128xf32> -> vector<2x128xf32>
    %c0_42 = arith.constant 0 : index
    %c0_43 = arith.constant 0 : index
    %108 = vector.load %arg9[%c0_42, %c0_43] : memref<1x128xf32, #tpu.memory_space<vmem>>, vector<1x128xf32>
    %109 = vector.broadcast %108 : vector<1x128xf32> to vector<2x128xf32>
    %110 = arith.addf %107, %109 : vector<2x128xf32>
    %111 = arith.negf %110 : vector<2x128xf32>
    %112 = math.exp %111 : vector<2x128xf32>
    %cst_44 = arith.constant 1.000000e+00 : f32
    %113 = vector.broadcast %cst_44 : f32 to vector<2x128xf32>
    %114 = arith.addf %113, %112 : vector<2x128xf32>
    %115 = arith.divf %113, %114 : vector<2x128xf32>
    %116 = vector.shape_cast %91 : vector<16x128xf32> to vector<2x8x128xf32>
    %117 = vector.shape_cast %115 : vector<2x128xf32> to vector<2x1x128xf32>
    %118 = vector.broadcast %117 : vector<2x1x128xf32> to vector<2x8x128xf32>
    %119 = arith.mulf %116, %118 : vector<2x8x128xf32>
    %120 = vector.shape_cast %119 : vector<2x8x128xf32> to vector<16x128xf32>
    %c0_45 = arith.constant 0 : index
    %c0_46 = arith.constant 0 : index
    %121 = vector.load %arg10[%c0_45, %c0_46] : memref<128x128xf32, #tpu.memory_space<vmem>>, vector<128x128xf32>
    %cst_47 = arith.constant dense<0.000000e+00> : vector<16x128xf32>
    %122 = tpu.matmul %120, %121, %cst_47 {dimension_numbers = #tpu.dot_dimension_numbers<[1], [0], [0], [1], [0, 0, 1, 1], [], []>} : vector<16x128xf32>, vector<128x128xf32>, vector<16x128xf32> -> vector<16x128xf32>
    %c0_48 = arith.constant 0 : index
    %c0_49 = arith.constant 0 : index
    %123 = vector.load %arg11[%c0_48, %c0_49] : memref<1x128xf32, #tpu.memory_space<vmem>>, vector<1x128xf32>
    %124 = vector.broadcast %123 : vector<1x128xf32> to vector<16x128xf32>
    %125 = arith.addf %122, %124 : vector<16x128xf32>
    %c0_50 = arith.constant 0 : index
    %c0_51 = arith.constant 0 : index
    %c0_52 = arith.constant 0 : index
    %126 = vector.load %arg12[%c0_50, %c0_51, %c0_52] : memref<1x16x128xf32, #tpu.memory_space<vmem>>, vector<1x16x128xf32>
    %127 = vector.shape_cast %126 : vector<1x16x128xf32> to vector<16x128xf32>
    %128 = vector.shape_cast %125 : vector<16x128xf32> to vector<1x16x128xf32>
    tpu.vector_store %arg12[%c0_50, %c0_51, %c0_52], %128 {strides = array<i32>} : memref<1x16x128xf32, #tpu.memory_space<vmem>>, vector<1x16x128xf32>,
    return
  }
  func.func @transform_0(%arg0: i32) -> (i32, i32, i32) {
    %c0_i32 = arith.constant 0 : i32
    %c0_i32_0 = arith.constant 0 : i32
    %c0_i32_1 = arith.constant 0 : i32
    return %arg0, %c0_i32, %c0_i32_0 : i32, i32, i32
  }
  func.func @transform_1(%arg0: i32) -> (i32, i32) {
    %c0_i32 = arith.constant 0 : i32
    %c0_i32_0 = arith.constant 0 : i32
    %c0_i32_1 = arith.constant 0 : i32
    return %c0_i32, %c0_i32_0 : i32, i32
  }
  func.func @transform_2(%arg0: i32) -> (i32, i32) {
    %c0_i32 = arith.constant 0 : i32
    %c0_i32_0 = arith.constant 0 : i32
    %c0_i32_1 = arith.constant 0 : i32
    return %c0_i32, %c0_i32_0 : i32, i32
  }
  func.func @transform_3(%arg0: i32) -> (i32, i32) {
    %c0_i32 = arith.constant 0 : i32
    %c0_i32_0 = arith.constant 0 : i32
    %c0_i32_1 = arith.constant 0 : i32
    return %c0_i32, %c0_i32_0 : i32, i32
  }
  func.func @transform_4(%arg0: i32) -> (i32, i32) {
    %c0_i32 = arith.constant 0 : i32
    %c0_i32_0 = arith.constant 0 : i32
    %c0_i32_1 = arith.constant 0 : i32
    return %c0_i32, %c0_i32_0 : i32, i32
  }
  func.func @transform_5(%arg0: i32) -> (i32, i32) {
    %c0_i32 = arith.constant 0 : i32
    %c0_i32_0 = arith.constant 0 : i32
    %c0_i32_1 = arith.constant 0 : i32
    return %c0_i32, %c0_i32_0 : i32, i32
  }
  func.func @transform_6(%arg0: i32) -> (i32, i32) {
    %c0_i32 = arith.constant 0 : i32
    %c0_i32_0 = arith.constant 0 : i32
    %c0_i32_1 = arith.constant 0 : i32
    return %c0_i32, %c0_i32_0 : i32, i32
  }
  func.func @transform_7(%arg0: i32) -> (i32, i32) {
    %c0_i32 = arith.constant 0 : i32
    %c0_i32_0 = arith.constant 0 : i32
    %c0_i32_1 = arith.constant 0 : i32
    return %c0_i32, %c0_i32_0 : i32, i32
  }
  func.func @transform_8(%arg0: i32) -> (i32, i32) {
    %c0_i32 = arith.constant 0 : i32
    %c0_i32_0 = arith.constant 0 : i32
    %c0_i32_1 = arith.constant 0 : i32
    return %c0_i32, %c0_i32_0 : i32, i32
  }
  func.func @transform_9(%arg0: i32) -> (i32, i32) {
    %c0_i32 = arith.constant 0 : i32
    %c0_i32_0 = arith.constant 0 : i32
    %c0_i32_1 = arith.constant 0 : i32
    return %c0_i32, %c0_i32_0 : i32, i32
  }
  func.func @transform_10(%arg0: i32) -> (i32, i32) {
    %c0_i32 = arith.constant 0 : i32
    %c0_i32_0 = arith.constant 0 : i32
    %c0_i32_1 = arith.constant 0 : i32
    return %c0_i32, %c0_i32_0 : i32, i32
  }
  func.func @transform_11(%arg0: i32) -> (i32, i32, i32) {
    %c0_i32 = arith.constant 0 : i32
    %c0_i32_0 = arith.constant 0 : i32
    %c0_i32_1 = arith.constant 0 : i32
    return %arg0, %c0_i32, %c0_i32_0 : i32, i32, i32
  }
}

</mosaic_0001>

<llo_original>
// kernel: tpu_custom_call.1
$region0: #{tpu_custom_call.1}
  #allocation0 [shape = 'u32[]', space=smem, size = 0x4, offset = 0x4, fixed_abs, tag = 'smem constant byte address 0x4 - core index']
  #allocation1 [shape = 'u32[72,128]{1,0:T(1,128)}', space=vmem, size = 0x9000, scoped, tag = 'internal scratch']
  %s0 = inlined_call_operand.vmem [shape: f32[1,64,32], index: 0, kind: input, shape index: {}]
  %s1 = inlined_call_operand.vmem [shape: f32[32,128], index: 1, kind: input, shape index: {}]
  %s2 = inlined_call_operand.vmem [shape: f32[1,128], index: 2, kind: input, shape index: {}]
  %s3 = inlined_call_operand.vmem [shape: f32[9,128], index: 3, kind: input, shape index: {}]
  %s4 = inlined_call_operand.vmem [shape: f32[1,128], index: 4, kind: input, shape index: {}]
  %s5 = inlined_call_operand.vmem [shape: f32[128,8], index: 5, kind: input, shape index: {}]
  %s6 = inlined_call_operand.vmem [shape: f32[1,8], index: 6, kind: input, shape index: {}]
  %s7 = inlined_call_operand.vmem [shape: f32[8,128], index: 7, kind: input, shape index: {}]
  %s8 = inlined_call_operand.vmem [shape: f32[1,128], index: 8, kind: input, shape index: {}]
  %s9 = inlined_call_operand.vmem [shape: f32[128,128], index: 9, kind: input, shape index: {}]
  %s10 = inlined_call_operand.vmem [shape: f32[1,128], index: 10, kind: input, shape index: {}]
  %s11 = inlined_call_operand.hbm [shape: f32[1,16,128], index: 11, kind: output, shape index: {}]
  %s12 = sld [smem:[#allocation0]]
  $region54: #{tpu_custom_call.1} parent=0
    _
  %s14 = ssub.s32 1, %s12
  %s15 = scalar_select 0, %s14, %s12
  $region1: #{tpu_custom_call.1} parent=0
    #allocation2 [shape = 'u8[8192]{0}', space=vmem, size = 0x2000, scoped, tag = 'output window, operand 0, single buffered']
    #allocation3 [shape = 's32[1]{0}', space=sflag, size = 0x4, scoped, tag = 'scoped memory for tpu_custom_call.1']
    %16 = vsyncpa [#allocation3], 0
    // Predicated region
    $region2: #{tpu_custom_call.1} parent=1 // pred_check
      _
    $region3: #{tpu_custom_call.1} parent=1 // pred_check_branch
      %18 = sbr.rel (0) target = $region5
    $region4: #{tpu_custom_call.1} parent=1 // pred_region
      _
    $region5: #{tpu_custom_call.1} parent=1 // pred_fallthru
      _
    // Predicated region
    $region6: #{tpu_custom_call.1} parent=1 // pred_check
      _
    $region7: #{tpu_custom_call.1} parent=1 // pred_check_branch
      %20 = sbr.rel (0) target = $region9
    $region8: #{tpu_custom_call.1} parent=1 // pred_region
      _
    $region9: #{tpu_custom_call.1} parent=1 // pred_fallthru
      _
    // Predicated region
    $region10: #{tpu_custom_call.1} parent=1 // pred_check
      _
    $region11: #{tpu_custom_call.1} parent=1 // pred_check_branch
      %22 = sbr.rel (0) target = $region13
    $region12: #{tpu_custom_call.1} parent=1 // pred_region
      _
    $region13: #{tpu_custom_call.1} parent=1 // pred_fallthru
      _
    // Predicated region
    $region14: #{tpu_custom_call.1} parent=1 // pred_check
      _
    $region15: #{tpu_custom_call.1} parent=1 // pred_check_branch
      %24 = sbr.rel (0) target = $region17
    $region16: #{tpu_custom_call.1} parent=1 // pred_region
      _
    $region17: #{tpu_custom_call.1} parent=1 // pred_fallthru
      _
    // Predicated region
    $region18: #{tpu_custom_call.1} parent=1 // pred_check
      _
    $region19: #{tpu_custom_call.1} parent=1 // pred_check_branch
      %26 = sbr.rel (0) target = $region21
    $region20: #{tpu_custom_call.1} parent=1 // pred_region
      _
    $region21: #{tpu_custom_call.1} parent=1 // pred_fallthru
      _
    // Predicated region
    $region22: #{tpu_custom_call.1} parent=1 // pred_check
      _
    $region23: #{tpu_custom_call.1} parent=1 // pred_check_branch
      %28 = sbr.rel (0) target = $region25
    $region24: #{tpu_custom_call.1} parent=1 // pred_region
      _
    $region25: #{tpu_custom_call.1} parent=1 // pred_fallthru
      _
    // Predicated region
    $region26: #{tpu_custom_call.1} parent=1 // pred_check
      _
    $region27: #{tpu_custom_call.1} parent=1 // pred_check_branch
      %30 = sbr.rel (0) target = $region29
    $region28: #{tpu_custom_call.1} parent=1 // pred_region
      _
    $region29: #{tpu_custom_call.1} parent=1 // pred_fallthru
      _
    // Predicated region
    $region30: #{tpu_custom_call.1} parent=1 // pred_check
      _
    $region31: #{tpu_custom_call.1} parent=1 // pred_check_branch
      %32 = sbr.rel (0) target = $region33
    $region32: #{tpu_custom_call.1} parent=1 // pred_region
      _
    $region33: #{tpu_custom_call.1} parent=1 // pred_fallthru
      _
    // Predicated region
    $region34: #{tpu_custom_call.1} parent=1 // pred_check
      _
    $region35: #{tpu_custom_call.1} parent=1 // pred_check_branch
      %34 = sbr.rel (0) target = $region37
    $region36: #{tpu_custom_call.1} parent=1 // pred_region
      _
    $region37: #{tpu_custom_call.1} parent=1 // pred_fallthru
      _
    // Predicated region
    $region38: #{tpu_custom_call.1} parent=1 // pred_check
      _
    $region39: #{tpu_custom_call.1} parent=1 // pred_check_branch
      %36 = sbr.rel (0) target = $region41
    $region40: #{tpu_custom_call.1} parent=1 // pred_region
      _
    $region41: #{tpu_custom_call.1} parent=1 // pred_fallthru
      _
    // Predicated region
    $region42: #{tpu_custom_call.1} parent=1 // pred_check
      _
    $region43: #{tpu_custom_call.1} parent=1 // pred_check_branch
      %38 = sbr.rel (0) target = $region45
    $region44: #{tpu_custom_call.1} parent=1 // pred_region
      _
    $region45: #{tpu_custom_call.1} parent=1 // pred_fallthru
      _
    %v39 = vld [vmem:[%s0] sm:$0xff]
    %v40 = vld [vmem:[%s0 + $0x8] sm:$0xff]
    %v41 = vld [vmem:[%s0 + $0x10] sm:$0xff]
    %v42 = vld [vmem:[%s0 + $0x18] sm:$0xff]
    %v43 = vld [vmem:[%s0 + $0x20] sm:$0xff]
    %v44 = vld [vmem:[%s0 + $0x28] sm:$0xff]
    %v45 = vld [vmem:[%s0 + $0x30] sm:$0xff]
    %v46 = vld [vmem:[%s0 + $0x38] sm:$0xff]
    %v47 = vld [vmem:[%s1] sm:$0xff]
    %v48 = vld [vmem:[%s1 + $0x8] sm:$0xff]
    %v49 = vld [vmem:[%s1 + $0x10] sm:$0xff]
    %v50 = vld [vmem:[%s1 + $0x18] sm:$0xff]
    %v51 = vld [vmem:[%s2] sm:$0x1]
    %v53 = vperm.slane %v51, 0
    %vm55 = vcmask 261120
    %v57 = vsel %vm55, %v39, 0
    %v60 = vsel %vm55, %v40, 0
    %v63 = vsel %vm55, %v41, 0
    %v66 = vsel %vm55, %v42, 0
    %v69 = vsel %vm55, %v43, 0
    %v72 = vsel %vm55, %v44, 0
    %v75 = vsel %vm55, %v45, 0
    %v78 = vsel %vm55, %v46, 0
    %80 = vmatpush.msra.mxu0 0.0
    %81 = vmatpush.msra.mxu0 0.0
    %82 = vmatpush.msra.mxu0 0.0
    %83 = vmatpush.msra.mxu0 0.0
    %84 = vmatpush.msra.mxu0 0.0
    %85 = vmatpush.msra.mxu0 0.0
    %86 = vmatpush.msra.mxu0 0.0
    %87 = vmatpush.msra.mxu0 0.0
    %88 = vmatpush.msra.mxu0 0.0
    %89 = vmatpush.msra.mxu0 0.0
    %90 = vmatpush.msra.mxu0 0.0
    %91 = vmatpush.msra.mxu0 0.0
    %92 = vmatpush.msra.mxu0 %v50
    %93 = vmatpush.msra.mxu0 %v49
    %94 = vmatpush.msra.mxu0 %v48
    %95 = vmatpush.msra.mxu0 %v47
    %96 = vmatmul.f32.gmra.mxu0 %v57
    %v97 = vpop.f32.mrf.mxu0
    %v98 = vadd.f32 %v53, %v97
    %99 = vmatmul.f32.gmra.mxu0 %v60
    %v100 = vpop.f32.mrf.mxu0
    %v101 = vadd.f32 %v53, %v100
    %102 = vmatmul.f32.gmra.mxu0 %v63
    %v103 = vpop.f32.mrf.mxu0
    %v104 = vadd.f32 %v53, %v103
    %105 = vmatmul.f32.gmra.mxu0 %v66
    %v106 = vpop.f32.mrf.mxu0
    %v107 = vadd.f32 %v53, %v106
    %108 = vmatmul.f32.gmra.mxu0 %v69
    %v109 = vpop.f32.mrf.mxu0
    %v110 = vadd.f32 %v53, %v109
    %111 = vmatmul.f32.gmra.mxu0 %v72
    %v112 = vpop.f32.mrf.mxu0
    %v113 = vadd.f32 %v53, %v112
    %114 = vmatmul.f32.gmra.mxu0 %v75
    %v115 = vpop.f32.mrf.mxu0
    %v116 = vadd.f32 %v53, %v115
    %117 = vmatmul.f32.gmra.mxu0 %v78
    %v118 = vpop.f32.mrf.mxu0
    %v119 = vadd.f32 %v53, %v118
    %120 = vdwg.mxu0
    %v121 = vmax.f32 %v98, 0.0
    %v122 = vmax.f32 %v101, 0.0
    %v123 = vmax.f32 %v104, 0.0
    %v124 = vmax.f32 %v107, 0.0
    %v125 = vmax.f32 %v110, 0.0
    %v126 = vmax.f32 %v113, 0.0
    %v127 = vmax.f32 %v116, 0.0
    %v128 = vmax.f32 %v119, 0.0
    %v129 = vlaneseq
    %v130 = vand.u32 %v129, 127
    %vm131 = vcmp.lt.s32.totalorder %v130, 16
    %132 = vrot.lane.b32.xlu0 %v123, 16
    %v133 = vpop.permute.xlu0 %132
    %134 = vrot.lane.b32.xlu0 %v124, 16
    %v135 = vpop.permute.xlu0 %134
    %v136 = vsel %vm131, 1, 0
    %vm137 = vcmp.eq.s32.totalorder %v136, 1
    %v138 = vsel %vm137, 0.0, %v133
    %v139 = vsel %vm137, 0.0, %v135
    %140 = vrot.lane.b32.xlu0 %v127, 16
    %v141 = vpop.permute.xlu0 %140
    %142 = vrot.lane.b32.xlu0 %v128, 16
    %v143 = vpop.permute.xlu0 %142
    %v144 = vsel %vm137, 0.0, %v141
    %v145 = vsel %vm137, 0.0, %v143
    %v146 = vld [vmem:[%s3 + $0x3] sm:$0x1]
    %v147 = vperm.slane %v146, 0
    %v148 = vmul.f32 %v147, %v138
    %v149 = vmul.f32 %v147, %v139
    %v150 = vld [vmem:[%s3 + $0x4] sm:$0x1]
    %v151 = vperm.slane %v150, 0
    %v152 = vmul.f32 %v151, %v121
    %v153 = vmul.f32 %v151, %v122
    %v154 = vadd.f32 %v148, %v152
    %v155 = vadd.f32 %v149, %v153
    %v156 = vld [vmem:[%s3 + $0x5] sm:$0x1]
    %v157 = vperm.slane %v156, 0
    %v158 = vmul.f32 %v157, %v123
    %v159 = vmul.f32 %v157, %v124
    %v160 = vadd.f32 %v154, %v158
    %v161 = vadd.f32 %v155, %v159
    %v162 = vld [vmem:[%s3 + $0x6] sm:$0x1]
    %v163 = vperm.slane %v162, 0
    %v164 = vmul.f32 %v163, %v144
    %v165 = vmul.f32 %v163, %v145
    %v166 = vld [vmem:[%s3 + $0x7] sm:$0x1]
    %v167 = vperm.slane %v166, 0
    %v168 = vmul.f32 %v167, %v125
    %v169 = vmul.f32 %v167, %v126
    %v170 = vadd.f32 %v164, %v168
    %v171 = vadd.f32 %v165, %v169
    %v172 = vld [vmem:[%s3 + $0x8] sm:$0x1]
    %v173 = vperm.slane %v172, 0
    %v174 = vmul.f32 %v173, %v127
    %v175 = vmul.f32 %v173, %v128
    %v176 = vadd.f32 %v170, %v174
    %v177 = vadd.f32 %v171, %v175
    %v178 = vadd.f32 %v160, %v176
    %v179 = vadd.f32 %v161, %v177
    %v180 = vld [vmem:[%s3] sm:$0x1]
    %v181 = vperm.slane %v180, 0
    %v182 = vmul.f32 %v181, %v144
    %v183 = vmul.f32 %v181, %v145
    %v184 = vld [vmem:[%s3 + $0x1] sm:$0x1]
    %v185 = vperm.slane %v184, 0
    %v186 = vmul.f32 %v185, %v125
    %v187 = vmul.f32 %v185, %v126
    %v188 = vadd.f32 %v182, %v186
    %v189 = vadd.f32 %v183, %v187
    %v190 = vld [vmem:[%s3 + $0x2] sm:$0x1]
    %v191 = vperm.slane %v190, 0
    %v192 = vmul.f32 %v191, %v127
    %v193 = vmul.f32 %v191, %v128
    %v194 = vadd.f32 %v188, %v192
    %v195 = vadd.f32 %v189, %v193
    %v196 = vlaneseq
    %v197 = vshrl.u32 %v196, 7
    %v198 = vadd.s32 %v197, 8
    %vm199 = vcmp.lt.s32.totalorder %v197, 0
    %v200 = vsub.s32 0, %v197
    %v201 = vsel %vm199, %v200, %v197
    %v202 = vshrl.u32 %v201, 3
    %v203 = vand.u32 %v201, 7
    %v204 = vsub.s32 0, %v203
    %v205 = vsel %vm199, %v204, %v203
    %vm206 = vcmp.lt.s32.totalorder %v198, 0
    %v207 = vsub.s32 0, %v198
    %v208 = vsel %vm206, %v207, %v198
    %v209 = vshrl.u32 %v208, 3
    %v210 = vand.u32 %v208, 7
    %v211 = vsub.s32 0, %v210
    %v212 = vsel %vm206, %v211, %v210
    %vm213 = vcmp.ne.s32.totalorder %v205, 0
    %vm214 = vcmp.ne.s32.totalorder %v212, 0
    %vm215 = vcmp.lt.s32.totalorder %v205, 0
    %vm216 = vcmp.lt.s32.totalorder %v212, 0
    %vm217 = vmand %vm215, %vm213
    %vm218 = vmand %vm216, %vm214
    %v219 = vadd.s32 %v205, 8
    %v220 = vadd.s32 %v212, 8
    %v221 = vsel %vm217, %v219, %v205
    %v222 = vsel %vm218, %v220, %v212
    %vm223 = vcmp.eq.s32.totalorder %v221, 0
    %vm224 = vcmp.eq.s32.totalorder %v222, 0
    %v225 = vrot.slane %v194, 7
    %v226 = vrot.slane %v195, 7
    %vm227 = vcmp.lt.s32.totalorder %v197, 1
    %v228 = vsel %vm227, %v225, %v226
    %v229 = vsel %vm227, %v226, %v225
    %v230 = vsel %vm223, 1, 0
    %v231 = vsel %vm224, 1, 0
    %vm232 = vcmp.eq.s32.totalorder %v230, 1
    %vm233 = vcmp.eq.s32.totalorder %v231, 1
    %v234 = vsel %vm232, 0.0, %v229
    %v235 = vsel %vm233, 0.0, %v228
    %v236 = vadd.f32 %v178, %v234
    %v237 = vadd.f32 %v179, %v235
    %v238 = vld [vmem:[%s4] sm:$0x1]
    %v240 = vperm.slane %v238, 0
    %v242 = vadd.f32 %v236, %v240
    %v243 = vadd.f32 %v237, %v240
    %v244 = vmax.f32 %v242, 0.0
    %v245 = vmax.f32 %v243, 0.0
    %v246 = vrot.slane %v244, 4
    %v247 = vadd.f32 %v244, %v246
    %v248 = vrot.slane %v247, 2
    %v249 = vadd.f32 %v247, %v248
    %v250 = vrot.slane %v249, 1
    %v251 = vadd.f32 %v249, %v250
    %v252 = vrot.slane %v245, 4
    %v253 = vadd.f32 %v245, %v252
    %v254 = vrot.slane %v253, 2
    %v255 = vadd.f32 %v253, %v254
    %v256 = vrot.slane %v255, 1
    %v257 = vadd.f32 %v255, %v256
    %vm258 = vcmask 1040384
    %v259 = vsel %vm258, %v251, %v257
    %v260 = vld [vmem:[%s5] sm:$0xff]
    %v261 = vld [vmem:[%s5 + $0x8] sm:$0xff]
    %v262 = vld [vmem:[%s5 + $0x10] sm:$0xff]
    %v263 = vld [vmem:[%s5 + $0x18] sm:$0xff]
    %v264 = vld [vmem:[%s5 + $0x20] sm:$0xff]
    %v265 = vld [vmem:[%s5 + $0x28] sm:$0xff]
    %v266 = vld [vmem:[%s5 + $0x30] sm:$0xff]
    %v267 = vld [vmem:[%s5 + $0x38] sm:$0xff]
    %v268 = vld [vmem:[%s5 + $0x40] sm:$0xff]
    %v269 = vld [vmem:[%s5 + $0x48] sm:$0xff]
    %v270 = vld [vmem:[%s5 + $0x50] sm:$0xff]
    %v271 = vld [vmem:[%s5 + $0x58] sm:$0xff]
    %v272 = vld [vmem:[%s5 + $0x60] sm:$0xff]
    %v273 = vld [vmem:[%s5 + $0x68] sm:$0xff]
    %v274 = vld [vmem:[%s5 + $0x70] sm:$0xff]
    %v275 = vld [vmem:[%s5 + $0x78] sm:$0xff]
    %v276 = vld [vmem:[%s6] sm:$0x1]
    %v278 = vperm.slane %v276, 0
    %280 = vmatpush.msra.mxu0 %v275
    %281 = vmatpush.msra.mxu0 %v274
    %282 = vmatpush.msra.mxu0 %v273
    %283 = vmatpush.msra.mxu0 %v272
    %284 = vmatpush.msra.mxu0 %v271
    %285 = vmatpush.msra.mxu0 %v270
    %286 = vmatpush.msra.mxu0 %v269
    %287 = vmatpush.msra.mxu0 %v268
    %288 = vmatpush.msra.mxu0 %v267
    %289 = vmatpush.msra.mxu0 %v266
    %290 = vmatpush.msra.mxu0 %v265
    %291 = vmatpush.msra.mxu0 %v264
    %292 = vmatpush.msra.mxu0 %v263
    %293 = vmatpush.msra.mxu0 %v262
    %294 = vmatpush.msra.mxu0 %v261
    %295 = vmatpush.msra.mxu0 %v260
    %296 = vmatmul.f32.gmra.mxu0 %v259
    %v297 = vpop.f32.mrf.mxu0
    %v298 = vadd.f32 %v278, %v297
    %299 = vdwg.mxu0
    %v300 = vmax.f32 %v298, 0.0
    %v301 = vld [vmem:[%s7] sm:$0xff]
    %v302 = vld [vmem:[%s8] sm:$0x1]
    %v304 = vperm.slane %v302, 0
    %vm306 = vcmask 64512
    %v308 = vsel %vm306, %v300, 0
    %310 = vmatpush.msra.mxu0 0.0
    %311 = vmatpush.msra.mxu0 0.0
    %312 = vmatpush.msra.mxu0 0.0
    %313 = vmatpush.msra.mxu0 0.0
    %314 = vmatpush.msra.mxu0 0.0
    %315 = vmatpush.msra.mxu0 0.0
    %316 = vmatpush.msra.mxu0 0.0
    %317 = vmatpush.msra.mxu0 0.0
    %318 = vmatpush.msra.mxu0 0.0
    %319 = vmatpush.msra.mxu0 0.0
    %320 = vmatpush.msra.mxu0 0.0
    %321 = vmatpush.msra.mxu0 0.0
    %322 = vmatpush.msra.mxu0 0.0
    %323 = vmatpush.msra.mxu0 0.0
    %324 = vmatpush.msra.mxu0 0.0
    %325 = vmatpush.msra.mxu0 %v301
    %326 = vmatmul.f32.gmra.mxu0 %v308
    %v327 = vpop.f32.mrf.mxu0
    %v328 = vadd.f32 %v304, %v327
    %329 = vdwg.mxu0
    %v330 = vxor.u32 %v328, 2147483648
    %v331 = vmul.f32 %v330, 1.442695
    %v332 = vpow.pop %v331
    %v333 = vadd.f32 %v332, 1.0
    %v334 = vrcp.pop %v333
    %v335 = vmul.f32 %v333, %v334
    %v336 = vsub.f32 1.0, %v335
    %v337 = vmul.f32 %v334, %v336
    %v338 = vadd.f32 %v334, %v337
    %vm339 = vweird.f32 %v333
    %vm340 = vweird.f32 %v334
    %vm341 = vmor %vm339, %vm340
    %v342 = vsel %vm341, %v334, %v338
    %v343 = vand.u32 2147483647, %v333
    %vm344 = vcmp.eq.f32.partialorder %v343, 8.507059e+37
    %v345 = vand.u32 %v333, 2147483648
    %v346 = vor.u32 1.1754944e-38, %v345
    %v347 = vsel %vm344, %v346, %v342
    %v348 = vmul.f32 1.0, %v347
    %v350 = vrot.slane %v348, 1
    %v351 = vperm.slane %v348, 0
    %v352 = vperm.slane %v350, 0
    %v355 = vmul.f32 %v244, %v351
    %v356 = vmul.f32 %v245, %v352
    %v357 = vld [vmem:[%s9] sm:$0xff]
    %v358 = vld [vmem:[%s9 + $0x8] sm:$0xff]
    %v359 = vld [vmem:[%s9 + $0x10] sm:$0xff]
    %v360 = vld [vmem:[%s9 + $0x18] sm:$0xff]
    %v361 = vld [vmem:[%s9 + $0x20] sm:$0xff]
    %v362 = vld [vmem:[%s9 + $0x28] sm:$0xff]
    %v363 = vld [vmem:[%s9 + $0x30] sm:$0xff]
    %v364 = vld [vmem:[%s9 + $0x38] sm:$0xff]
    %v365 = vld [vmem:[%s9 + $0x40] sm:$0xff]
    %v366 = vld [vmem:[%s9 + $0x48] sm:$0xff]
    %v367 = vld [vmem:[%s9 + $0x50] sm:$0xff]
    %v368 = vld [vmem:[%s9 + $0x58] sm:$0xff]
    %v369 = vld [vmem:[%s9 + $0x60] sm:$0xff]
    %v370 = vld [vmem:[%s9 + $0x68] sm:$0xff]
    %v371 = vld [vmem:[%s9 + $0x70] sm:$0xff]
    %v372 = vld [vmem:[%s9 + $0x78] sm:$0xff]
    %v373 = vld [vmem:[%s10] sm:$0x1]
    %v375 = vperm.slane %v373, 0
    %377 = vmatpush.msra.mxu0 %v372
    %378 = vmatpush.msra.mxu0 %v371
    %379 = vmatpush.msra.mxu0 %v370
    %380 = vmatpush.msra.mxu0 %v369
    %381 = vmatpush.msra.mxu0 %v368
    %382 = vmatpush.msra.mxu0 %v367
    %383 = vmatpush.msra.mxu0 %v366
    %384 = vmatpush.msra.mxu0 %v365
    %385 = vmatpush.msra.mxu0 %v364
    %386 = vmatpush.msra.mxu0 %v363
    %387 = vmatpush.msra.mxu0 %v362
    %388 = vmatpush.msra.mxu0 %v361
    %389 = vmatpush.msra.mxu0 %v360
    %390 = vmatpush.msra.mxu0 %v359
    %391 = vmatpush.msra.mxu0 %v358
    %392 = vmatpush.msra.mxu0 %v357
    %393 = vmatmul.f32.gmra.mxu0 %v355
    %v394 = vpop.f32.mrf.mxu0
    %v395 = vadd.f32 %v375, %v394
    %396 = vmatmul.f32.gmra.mxu0 %v356
    %v397 = vpop.f32.mrf.mxu0
    %v398 = vadd.f32 %v375, %v397
    %399 = vdwg.mxu0
    %400 = vst [vmem:[#allocation2] sm:$0xff] %v395
    %401 = vst [vmem:[#allocation2 + $0x8] sm:$0xff] %v398
    // Predicated region
    $region46: #{tpu_custom_call.1} parent=1 // pred_check
      _
    $region47: #{tpu_custom_call.1} parent=1 // pred_check_branch
      %403 = sbr.rel (0) target = $region49
    $region48: #{tpu_custom_call.1} parent=1 // pred_region
      %405 = vsyncadd [#allocation3], 0
      %s406 = sshll.u32 [#allocation2], 4
      %s407 = int_to_ptr.vmem [resolvable:$true] %s406
      %s408 = sshll.u32 %s11, 4
      %s409 = int_to_ptr.hbm [resolvable:$true] %s408
      %414 = dma.vmem_to_hbm [thread:$0]  %s407, 256, %s409, [#allocation3], 128, 128, 8
    $region49: #{tpu_custom_call.1} parent=1 // pred_fallthru
      _
    // Predicated region
    $region50: #{tpu_custom_call.1} parent=1 // pred_check
      _
    $region51: #{tpu_custom_call.1} parent=1 // pred_check_branch
      %416 = sbr.rel (0) target = $region53
    $region52: #{tpu_custom_call.1} parent=1 // pred_region
      %418 = dma.done [#allocation3], 256
    $region53: #{tpu_custom_call.1} parent=1 // pred_fallthru
      _
    %419 = vsyncpa [#allocation3], 1

</llo_original>
